<compile_context>
chip_gen: v7x
topology: tpu7x:2x2x1
jax: 0.10.0
libtpu: 0.0.40
codegen_flags: <defaults>
</compile_context>

<pallas_src>
import jax
import jax.numpy as jnp
from jax.experimental import pallas as pl
from jax.experimental.pallas import tpu as pltpu


def _round_up(x, m):
    return ((x + m - 1) // m) * m


# ----------------------------------------------------------------------------
# Kernel 1: fused embed-gather + synthetic encoder + answer-score epilogue,
# computed in transposed (feature, row) layout so the output is lane-dense.
#   onehot_T = (iota_V == ids)                      (V, T)   masked ids = -1
#   x_T      = embed_T @ onehot_T                   (H, T)   MXU gather
#   h_T      = tanh(W_T @ x_T + b)                  (H, T)   f32 bias + tanh
#   score    = answer_w @ h_T                       (1, T)   lane-dense out
# ----------------------------------------------------------------------------
def encode_score_kernel(ids_ref, embT_ref, wT_ref, b_ref, wa_ref, out_ref):
    ids = ids_ref[...]                                            # (1, T) int32
    V = embT_ref.shape[1]
    T = ids.shape[1]
    iota_v = jax.lax.broadcasted_iota(jnp.int32, (V, T), 0)       # (V, T)
    # Masked / padded rows carry id == -1 -> all-zero one-hot column -> x = 0.
    onehot_t = (iota_v == ids).astype(embT_ref.dtype)             # (V, T) bf16

    x_t = jnp.dot(embT_ref[...], onehot_t,
                  preferred_element_type=jnp.float32)             # (H, T) f32
    h_t = jnp.tanh(
        jnp.dot(wT_ref[...], x_t.astype(wT_ref.dtype),
                preferred_element_type=jnp.float32) + b_ref[...]) # (H, T) f32
    out_ref[...] = jnp.dot(wa_ref[...], h_t.astype(wa_ref.dtype),
                           preferred_element_type=jnp.float32)    # (1, T) f32


def encode_scores(tok_ids_masked, embed_t, w_t, b_col, wa_row, tile_n=1024):
    """tok_ids_masked: (C, B, P) int32 prediction-row token ids, -1 where the
    attention mask is 0.  Weights already transposed / cast:
      embed_t (H, V) bf16, w_t (H, H) bf16, b_col (H, 1) f32, wa_row (1, H) bf16.
    Returns per-chunk answer scores (C, B, P) f32."""
    C, B, P = tok_ids_masked.shape
    N = C * B * P
    H, V = embed_t.shape

    # Rows live on the lane axis -> tile in multiples of 128 lanes.  Padding is
    # done on 4-byte ids only (cheap), never on H-wide activation rows.
    tile = min(tile_n, _round_up(N, 128))
    n_pad = _round_up(N, tile)
    ids = tok_ids_masked.reshape(1, N)
    if n_pad > N:
        ids = jnp.concatenate(
            [ids, jnp.full((1, n_pad - N), -1, jnp.int32)], axis=1)

    cost = pl.CostEstimate(
        flops=2 * n_pad * (V * H + H * H + H),
        transcendentals=n_pad * H,
        bytes_accessed=4 * n_pad + 2 * H * V + 2 * H * H + 4 * H + 2 * H
        + 4 * n_pad,
    )

    scores = pl.pallas_call(
        encode_score_kernel,
        out_shape=jax.ShapeDtypeStruct((1, n_pad), jnp.float32),
        grid=(n_pad // tile,),
        in_specs=[
            pl.BlockSpec((1, tile), lambda i: (0, i)),   # token ids (pipelined)
            pl.BlockSpec((H, V), lambda i: (0, 0)),      # embed^T resident
            pl.BlockSpec((H, H), lambda i: (0, 0)),      # W^T resident
            pl.BlockSpec((H, 1), lambda i: (0, 0)),      # bias column resident
            pl.BlockSpec((1, H), lambda i: (0, 0)),      # answer_w row resident
        ],
        out_specs=pl.BlockSpec((1, tile), lambda i: (0, i)),   # lane-dense
        compiler_params=pltpu.CompilerParams(
            dimension_semantics=("parallel",),   # shards row tiles across TCs
            vmem_limit_bytes=48 * 1024 * 1024,   # fits v7x's 64 MiB/TC budget
        ),
        cost_estimate=cost,
    )(ids, embed_t, w_t, b_col, wa_row)
    return scores[0, :N].reshape(C, B, P)


# ----------------------------------------------------------------------------
# Kernel 2: QA head — chunk mean, CE-sum loss, argmax predictions, num_correct.
# Inputs are tiny: per-chunk scores (C, B, P) + correct indices as (B, 1).
# ----------------------------------------------------------------------------
def qa_head_kernel(scores_ref, correct_ref,
                   loss_ref, ncorrect_ref, predidx_ref, avg_ref):
    s = scores_ref[...]                                    # (C, B, P) f32
    C, B, P = s.shape

    avg = jnp.mean(s, axis=0)                              # (B, P) chunk mean
    avg_ref[...] = avg

    corr = correct_ref[...]                                # (B, 1) int32
    iota_p = jax.lax.broadcasted_iota(jnp.int32, (B, P), 1)

    # CrossEntropyLoss(reduction='sum'): sum_b [logsumexp(avg_b) - avg_b[y_b]]
    m = jnp.max(avg, axis=1, keepdims=True)                # (B, 1)
    lse = m + jnp.log(jnp.sum(jnp.exp(avg - m), axis=1, keepdims=True))
    onehot = iota_p == corr                                # broadcast compare
    correct_score = jnp.sum(jnp.where(onehot, avg, 0.0), axis=1, keepdims=True)
    loss_ref[0, 0] = jnp.sum(lse - correct_score)

    # argmax with first-maximal-index tie-breaking (matches torch.argmax).
    is_max = avg == m
    pred_idx = jnp.min(jnp.where(is_max, iota_p, P), axis=1, keepdims=True)
    predidx_ref[...] = pred_idx.astype(jnp.int32)
    ncorrect_ref[0, 0] = jnp.sum((pred_idx == corr).astype(jnp.int32))


def qa_head(scores, correct_index):
    """scores: (C, B, P) f32, correct_index: (B,) int."""
    C, B, P = scores.shape
    correct = correct_index.reshape(B, 1).astype(jnp.int32)
    outs = pl.pallas_call(
        qa_head_kernel,
        out_shape=(
            jax.ShapeDtypeStruct((1, 1), jnp.float32),     # loss
            jax.ShapeDtypeStruct((1, 1), jnp.int32),       # num_correct
            jax.ShapeDtypeStruct((B, 1), jnp.int32),       # predicted indices
            jax.ShapeDtypeStruct((B, P), jnp.float32),     # average scores
        ),
        in_specs=[
            pl.BlockSpec(memory_space=pltpu.MemorySpace.VMEM),
            pl.BlockSpec(memory_space=pltpu.MemorySpace.VMEM),
        ],
        out_specs=(
            pl.BlockSpec(memory_space=pltpu.MemorySpace.VMEM),
            pl.BlockSpec(memory_space=pltpu.MemorySpace.VMEM),
            pl.BlockSpec(memory_space=pltpu.MemorySpace.VMEM),
            pl.BlockSpec(memory_space=pltpu.MemorySpace.VMEM),
        ),
    )(scores, correct)
    loss, ncorrect, pred_idx, avg = outs
    return loss[0, 0], ncorrect[0, 0], pred_idx[:, 0], avg


# ----------------------------------------------------------------------------
# Forward pass (mirrors WikihopQAModel.forward / get_activations_roberta)
# ----------------------------------------------------------------------------
def wikihop_forward(params, candidate_ids, support_ids, prediction_indices,
                    correct_index, max_seq_len, pad_token_id=0):
    B, cand_len = candidate_ids.shape
    sup_len = support_ids.shape[1]

    # get_activations_roberta chunking (static, trace-time).
    if cand_len + sup_len <= max_seq_len:
        ranges = [(0, sup_len)]
    else:
        avail = max_seq_len - cand_len
        ranges = [(s, min(s + avail, sup_len)) for s in range(0, sup_len, avail)]

    tok_chunks = []
    for start, end in ranges:
        tok = jnp.concatenate([candidate_ids, support_ids[:, start:end]], axis=1)
        mask = jnp.ones(tok.shape, jnp.float32)
        pad_len = max_seq_len - tok.shape[1]
        if pad_len > 0:  # pad_to_max_length
            tok = jnp.pad(tok, ((0, 0), (0, pad_len)), constant_values=pad_token_id)
            mask = jnp.pad(mask, ((0, 0), (0, pad_len)), constant_values=0.0)
        # Row-independent synthetic encoder => only prediction rows are
        # consumed; gather their token ids and fold the mask into the id
        # (masked tokens -> -1 so the in-kernel one-hot gather yields zeros).
        tok_p = jnp.take(tok, prediction_indices, axis=1)           # (B, P)
        mask_p = jnp.take(mask, prediction_indices, axis=1)         # (B, P)
        tok_chunks.append(jnp.where(mask_p > 0.5, tok_p, -1).astype(jnp.int32))

    tok_pred = jnp.stack(tok_chunks, axis=0)                        # (C, B, P)

    H = params["w_enc"].shape[0]
    embed_t = params["embed"].T.astype(jnp.bfloat16)                # (H, V)
    w_t = params["w_enc"].T.astype(jnp.bfloat16)                    # (H, H)
    b_col = params["b_enc"].reshape(H, 1).astype(jnp.float32)       # (H, 1)
    wa_row = params["answer_w"].reshape(1, H).astype(jnp.bfloat16)  # (1, H)

    scores = encode_scores(tok_pred, embed_t, w_t, b_col, wa_row)   # (C, B, P)
    loss, num_correct, predicted, avg_scores = qa_head(scores, correct_index)
    batch_size = jnp.ones((1,), jnp.int32) * B
    return loss, batch_size, num_correct, predicted, avg_scores


# Pure-JAX f32 reference of the same math (computes FULL activations then
# gathers, so it also validates the prediction-rows-only shortcut).
def reference_forward(params, candidate_ids, support_ids, prediction_indices,
                      correct_index, max_seq_len, pad_token_id=0):
    B, cand_len = candidate_ids.shape
    sup_len = support_ids.shape[1]
    if cand_len + sup_len <= max_seq_len:
        ranges = [(0, sup_len)]
    else:
        avail = max_seq_len - cand_len
        ranges = [(s, min(s + avail, sup_len)) for s in range(0, sup_len, avail)]
    acts = []
    for start, end in ranges:
        tok = jnp.concatenate([candidate_ids, support_ids[:, start:end]], axis=1)
        mask = jnp.ones(tok.shape, jnp.float32)
        pad_len = max_seq_len - tok.shape[1]
        if pad_len > 0:
            tok = jnp.pad(tok, ((0, 0), (0, pad_len)), constant_values=pad_token_id)
            mask = jnp.pad(mask, ((0, 0), (0, pad_len)), constant_values=0.0)
        emb = params["embed"][tok] * mask[..., None]
        acts.append(jnp.tanh(emb @ params["w_enc"] + params["b_enc"][0]))
    scores = [jnp.einsum("bph,h->bp", jnp.take(a, prediction_indices, axis=1),
                         params["answer_w"][0]) for a in acts]
    avg = jnp.mean(jnp.stack(scores, axis=-1), axis=-1)
    logsm = avg - jax.scipy.special.logsumexp(avg, axis=1, keepdims=True)
    loss = -jnp.sum(logsm[jnp.arange(B), correct_index])
    pred = jnp.argmax(avg, axis=1)
    ncorrect = jnp.sum((pred == correct_index).astype(jnp.int32))
    return loss, pred, ncorrect, avg


if __name__ == "__main__":
    key = jax.random.PRNGKey(0)
    k_emb, k_w, k_b, k_ans, k_cand, k_sup, k_pred = jax.random.split(key, 7)

    # Small synthetic config
    VOCAB, H = 64, 128
    B, CAND_LEN, SUP_LEN, MAX_SEQ_LEN = 2, 8, 24, 24   # -> 2 chunks
    NUM_PRED = 4
    PAD_ID = 0

    params = {
        "embed": jax.random.normal(k_emb, (VOCAB, H), jnp.float32) * 0.1,
        "w_enc": jax.random.normal(k_w, (H, H), jnp.float32) * (1.0 / H ** 0.5),
        "b_enc": jax.random.normal(k_b, (1, H), jnp.float32) * 0.02,
        "answer_w": jax.random.normal(k_ans, (1, H), jnp.float32) * (1.0 / H ** 0.5),
    }

    candidate_ids = jax.random.randint(k_cand, (B, CAND_LEN), 4, VOCAB, jnp.int32)
    support_ids = jax.random.randint(k_sup, (B, SUP_LEN), 4, VOCAB, jnp.int32)
    prediction_indices = jnp.array([0, 2, 4, 6], jnp.int32)      # into candidate span
    correct_prediction_index = jnp.array([1, 3], jnp.int32)

    loss, batch_size, num_correct, predicted, avg_scores = wikihop_forward(
        params, candidate_ids, support_ids, prediction_indices,
        correct_prediction_index, MAX_SEQ_LEN, PAD_ID)
    jax.block_until_ready((loss, batch_size, num_correct, predicted, avg_scores))

    ref_loss, ref_pred, ref_ncorrect, ref_avg = reference_forward(
        params, candidate_ids, support_ids, prediction_indices,
        correct_prediction_index, MAX_SEQ_LEN, PAD_ID)

    # bf16 MXU path: scores/loss are checked against the f32 reference within
    # a bf16-appropriate tolerance; the in-kernel argmax / num_correct logic is
    # checked against JAX on the kernel's own (tolerance-verified) averaged
    # scores so a sub-1e-3 score perturbation cannot flip a discrete assert.
    assert jnp.allclose(loss, ref_loss, rtol=5e-2, atol=5e-3), (loss, ref_loss)
    assert jnp.allclose(avg_scores, ref_avg, rtol=5e-2, atol=5e-3)
    assert bool(jnp.all(predicted == jnp.argmax(avg_scores, axis=1)))
    assert int(num_correct) == int(jnp.sum(
        (predicted == correct_prediction_index).astype(jnp.int32)))
    assert int(batch_size[0]) == B

    print("KERNEL_OK")
</pallas_src>

<mosaic_0001>
module attributes {stable_mosaic.version = 11 : i64} {
  func.func @encode_score_kernel(%arg0: i32, %arg1: memref<1x128xi32, #tpu.memory_space<vmem>>, %arg2: memref<128x64xbf16, #tpu.memory_space<vmem>>, %arg3: memref<128x128xbf16, #tpu.memory_space<vmem>>, %arg4: memref<128x1xf32, #tpu.memory_space<vmem>>, %arg5: memref<1x128xbf16, #tpu.memory_space<vmem>>, %arg6: memref<1x128xf32, #tpu.memory_space<vmem>>) attributes {dimension_semantics = [#tpu.dimension_semantics<parallel>], iteration_bounds = array<i64: 1>, scalar_prefetch = 0 : i64, scratch_operands = 0 : i64, tpu.core_type = #tpu.core_type<tc>, window_params = [{transform_indices = @transform_0, window_bounds = array<i64: 1, 128>}, {pipeline_mode = #tpu.pipeline_mode<synchronous>, transform_indices = @transform_1, window_bounds = array<i64: 128, 64>}, {pipeline_mode = #tpu.pipeline_mode<synchronous>, transform_indices = @transform_2, window_bounds = array<i64: 128, 128>}, {pipeline_mode = #tpu.pipeline_mode<synchronous>, transform_indices = @transform_3, window_bounds = array<i64: 128, 1>}, {pipeline_mode = #tpu.pipeline_mode<synchronous>, transform_indices = @transform_4, window_bounds = array<i64: 1, 128>}, {transform_indices = @transform_5, window_bounds = array<i64: 1, 128>}]} {
    %c0 = arith.constant 0 : index
    %c0_0 = arith.constant 0 : index
    %0 = vector.load %arg1[%c0, %c0_0] : memref<1x128xi32, #tpu.memory_space<vmem>>, vector<1x128xi32>
    %1 = tpu.iota {dimensions = array<i32: 0>} : vector<64x128xi32>
    %2 = vector.broadcast %0 : vector<1x128xi32> to vector<64x128xi32>
    %3 = arith.cmpi eq, %1, %2 : vector<64x128xi32>
    %4 = arith.extui %3 : vector<64x128xi1> to vector<64x128xi32>
    %5 = arith.sitofp %4 : vector<64x128xi32> to vector<64x128xf32>
    %6 = arith.truncf %5 : vector<64x128xf32> to vector<64x128xbf16>
    %c0_1 = arith.constant 0 : index
    %c0_2 = arith.constant 0 : index
    %7 = vector.load %arg2[%c0_1, %c0_2] : memref<128x64xbf16, #tpu.memory_space<vmem>>, vector<128x64xbf16>
    %cst = arith.constant dense<0.000000e+00> : vector<128x128xf32>
    %8 = tpu.matmul %7, %6, %cst {dimension_numbers = #tpu.dot_dimension_numbers<[1], [0], [0], [1], [0, 0, 1, 1], [], []>} : vector<128x64xbf16>, vector<64x128xbf16>, vector<128x128xf32> -> vector<128x128xf32>
    %c0_3 = arith.constant 0 : index
    %c0_4 = arith.constant 0 : index
    %9 = vector.load %arg3[%c0_3, %c0_4] : memref<128x128xbf16, #tpu.memory_space<vmem>>, vector<128x128xbf16>
    %10 = arith.truncf %8 : vector<128x128xf32> to vector<128x128xbf16>
    %cst_5 = arith.constant dense<0.000000e+00> : vector<128x128xf32>
    %11 = tpu.matmul %9, %10, %cst_5 {dimension_numbers = #tpu.dot_dimension_numbers<[1], [0], [0], [1], [0, 0, 1, 1], [], []>} : vector<128x128xbf16>, vector<128x128xbf16>, vector<128x128xf32> -> vector<128x128xf32>
    %c0_6 = arith.constant 0 : index
    %c0_7 = arith.constant 0 : index
    %12 = vector.load %arg4[%c0_6, %c0_7] : memref<128x1xf32, #tpu.memory_space<vmem>>, vector<128x1xf32>
    %13 = vector.broadcast %12 : vector<128x1xf32> to vector<128x128xf32>
    %14 = arith.addf %11, %13 : vector<128x128xf32>
    %15 = math.tanh %14 : vector<128x128xf32>
    %c0_8 = arith.constant 0 : index
    %c0_9 = arith.constant 0 : index
    %16 = vector.load %arg5[%c0_8, %c0_9] : memref<1x128xbf16, #tpu.memory_space<vmem>>, vector<1x128xbf16>
    %17 = arith.truncf %15 : vector<128x128xf32> to vector<128x128xbf16>
    %cst_10 = arith.constant dense<0.000000e+00> : vector<1x128xf32>
    %18 = tpu.matmul %16, %17, %cst_10 {dimension_numbers = #tpu.dot_dimension_numbers<[1], [0], [0], [1], [0, 0, 1, 1], [], []>} : vector<1x128xbf16>, vector<128x128xbf16>, vector<1x128xf32> -> vector<1x128xf32>
    %c0_11 = arith.constant 0 : index
    %c0_12 = arith.constant 0 : index
    %19 = vector.load %arg6[%c0_11, %c0_12] : memref<1x128xf32, #tpu.memory_space<vmem>>, vector<1x128xf32>
    tpu.vector_store %arg6[%c0_11, %c0_12], %18 {strides = array<i32>} : memref<1x128xf32, #tpu.memory_space<vmem>>, vector<1x128xf32>,
    return
  }
  func.func @transform_0(%arg0: i32) -> (i32, i32) {
    %c0_i32 = arith.constant 0 : i32
    %c0_i32_0 = arith.constant 0 : i32
    return %c0_i32, %arg0 : i32, i32
  }
  func.func @transform_1(%arg0: i32) -> (i32, i32) {
    %c0_i32 = arith.constant 0 : i32
    %c0_i32_0 = arith.constant 0 : i32
    %c0_i32_1 = arith.constant 0 : i32
    return %c0_i32, %c0_i32_0 : i32, i32
  }
  func.func @transform_2(%arg0: i32) -> (i32, i32) {
    %c0_i32 = arith.constant 0 : i32
    %c0_i32_0 = arith.constant 0 : i32
    %c0_i32_1 = arith.constant 0 : i32
    return %c0_i32, %c0_i32_0 : i32, i32
  }
  func.func @transform_3(%arg0: i32) -> (i32, i32) {
    %c0_i32 = arith.constant 0 : i32
    %c0_i32_0 = arith.constant 0 : i32
    %c0_i32_1 = arith.constant 0 : i32
    return %c0_i32, %c0_i32_0 : i32, i32
  }
  func.func @transform_4(%arg0: i32) -> (i32, i32) {
    %c0_i32 = arith.constant 0 : i32
    %c0_i32_0 = arith.constant 0 : i32
    %c0_i32_1 = arith.constant 0 : i32
    return %c0_i32, %c0_i32_0 : i32, i32
  }
  func.func @transform_5(%arg0: i32) -> (i32, i32) {
    %c0_i32 = arith.constant 0 : i32
    %c0_i32_0 = arith.constant 0 : i32
    return %c0_i32, %arg0 : i32, i32
  }
}

</mosaic_0001>

<llo_original>
// kernel: tpu_custom_call.1
$region0: #{tpu_custom_call.1}
  #allocation0 [shape = 'u32[]', space=smem, size = 0x4, offset = 0x4, fixed_abs, tag = 'smem constant byte address 0x4 - core index']
  #allocation1 [shape = 'u32[144,128]{1,0:T(1,128)}', space=vmem, size = 0x12000, scoped, tag = 'internal scratch']
  %s0 = inlined_call_operand.vmem [shape: s32[1,128], index: 0, kind: input, shape index: {}]
  %s1 = inlined_call_operand.vmem [shape: bf16[128,64], index: 1, kind: input, shape index: {}]
  %s2 = inlined_call_operand.vmem [shape: bf16[128,128], index: 2, kind: input, shape index: {}]
  %s3 = inlined_call_operand.vmem [shape: f32[128,1], index: 3, kind: input, shape index: {}]
  %s4 = inlined_call_operand.vmem [shape: bf16[1,128], index: 4, kind: input, shape index: {}]
  %s5 = inlined_call_operand.hbm [shape: f32[1,128], index: 5, kind: output, shape index: {}]
  %s6 = sld [smem:[#allocation0]]
  $region30: #{tpu_custom_call.1} parent=0
    _
  %s8 = ssub.s32 1, %s6
  %s9 = scalar_select 0, %s8, %s6
  $region1: #{tpu_custom_call.1} parent=0
    #allocation2 [shape = 'u8[512]{0}', space=vmem, size = 0x400, scoped, tag = 'output window, operand 0, single buffered']
    #allocation3 [shape = 's32[1]{0}', space=sflag, size = 0x4, scoped, tag = 'scoped memory for tpu_custom_call.1']
    %10 = vsyncpa [#allocation3], 0
    // Predicated region
    $region2: #{tpu_custom_call.1} parent=1 // pred_check
      _
    $region3: #{tpu_custom_call.1} parent=1 // pred_check_branch
      %12 = sbr.rel (0) target = $region5
    $region4: #{tpu_custom_call.1} parent=1 // pred_region
      _
    $region5: #{tpu_custom_call.1} parent=1 // pred_fallthru
      _
    // Predicated region
    $region6: #{tpu_custom_call.1} parent=1 // pred_check
      _
    $region7: #{tpu_custom_call.1} parent=1 // pred_check_branch
      %14 = sbr.rel (0) target = $region9
    $region8: #{tpu_custom_call.1} parent=1 // pred_region
      _
    $region9: #{tpu_custom_call.1} parent=1 // pred_fallthru
      _
    // Predicated region
    $region10: #{tpu_custom_call.1} parent=1 // pred_check
      _
    $region11: #{tpu_custom_call.1} parent=1 // pred_check_branch
      %16 = sbr.rel (0) target = $region13
    $region12: #{tpu_custom_call.1} parent=1 // pred_region
      _
    $region13: #{tpu_custom_call.1} parent=1 // pred_fallthru
      _
    // Predicated region
    $region14: #{tpu_custom_call.1} parent=1 // pred_check
      _
    $region15: #{tpu_custom_call.1} parent=1 // pred_check_branch
      %18 = sbr.rel (0) target = $region17
    $region16: #{tpu_custom_call.1} parent=1 // pred_region
      _
    $region17: #{tpu_custom_call.1} parent=1 // pred_fallthru
      _
    // Predicated region
    $region18: #{tpu_custom_call.1} parent=1 // pred_check
      _
    $region19: #{tpu_custom_call.1} parent=1 // pred_check_branch
      %20 = sbr.rel (0) target = $region21
    $region20: #{tpu_custom_call.1} parent=1 // pred_region
      _
    $region21: #{tpu_custom_call.1} parent=1 // pred_fallthru
      _
    %v22 = vld [vmem:[%s0] sm:$0x1]
    %v23 = vlaneseq
    %v24 = vshrl.u32 %v23, 7
    %v25 = vadd.s32 %v24, 8
    %v26 = vadd.s32 %v24, 16
    %v27 = vadd.s32 %v24, 24
    %v28 = vadd.s32 %v24, 32
    %v29 = vadd.s32 %v24, 40
    %v30 = vadd.s32 %v24, 48
    %v31 = vadd.s32 %v24, 56
    %v32 = vlaneseq
    %v33 = vshrl.u32 %v32, 7
    %v34 = vsub.s32 0, %v33
    %v35 = vrot.slane %v22, %v34
    %vm36 = vcmp.eq.s32.totalorder %v24, %v35
    %vm37 = vcmp.eq.s32.totalorder %v25, %v35
    %vm38 = vcmp.eq.s32.totalorder %v26, %v35
    %vm39 = vcmp.eq.s32.totalorder %v27, %v35
    %vm40 = vcmp.eq.s32.totalorder %v28, %v35
    %vm41 = vcmp.eq.s32.totalorder %v29, %v35
    %vm42 = vcmp.eq.s32.totalorder %v30, %v35
    %vm43 = vcmp.eq.s32.totalorder %v31, %v35
    %v44 = vsel %vm36, 1, 0
    %v45 = vsel %vm37, 1, 0
    %v46 = vsel %vm38, 1, 0
    %v47 = vsel %vm39, 1, 0
    %v48 = vsel %vm40, 1, 0
    %v49 = vsel %vm41, 1, 0
    %v50 = vsel %vm42, 1, 0
    %v51 = vsel %vm43, 1, 0
    %v52 = vcvt.s32.f32 %v44
    %v53 = vcvt.s32.f32 %v45
    %v54 = vcvt.s32.f32 %v46
    %v55 = vcvt.s32.f32 %v47
    %v56 = vcvt.s32.f32 %v48
    %v57 = vcvt.s32.f32 %v49
    %v58 = vcvt.s32.f32 %v50
    %v59 = vcvt.s32.f32 %v51
    %v60 = vpack.c.bf16 %v53, %v52
    %v61 = vpack.c.bf16 %v55, %v54
    %v62 = vpack.c.bf16 %v57, %v56
    %v63 = vpack.c.bf16 %v59, %v58
    %v64 = vld [vmem:[%s1] sm:$0xf]
    %v65 = vld [vmem:[%s1 + $0x4] sm:$0xf]
    %v66 = vld [vmem:[%s1 + $0x8] sm:$0xf]
    %v67 = vld [vmem:[%s1 + $0xc] sm:$0xf]
    %v68 = vld [vmem:[%s1 + $0x10] sm:$0xf]
    %v69 = vld [vmem:[%s1 + $0x14] sm:$0xf]
    %v70 = vld [vmem:[%s1 + $0x18] sm:$0xf]
    %v71 = vld [vmem:[%s1 + $0x1c] sm:$0xf]
    %v72 = vld [vmem:[%s1 + $0x20] sm:$0xf]
    %v73 = vld [vmem:[%s1 + $0x24] sm:$0xf]
    %v74 = vld [vmem:[%s1 + $0x28] sm:$0xf]
    %v75 = vld [vmem:[%s1 + $0x2c] sm:$0xf]
    %v76 = vld [vmem:[%s1 + $0x30] sm:$0xf]
    %v77 = vld [vmem:[%s1 + $0x34] sm:$0xf]
    %v78 = vld [vmem:[%s1 + $0x38] sm:$0xf]
    %v79 = vld [vmem:[%s1 + $0x3c] sm:$0xf]
    %v96 = vunpack.c.l.b16 %v64
    %v97 = vunpack.c.l.b16 %v65
    %v98 = vunpack.c.l.b16 %v66
    %v99 = vunpack.c.l.b16 %v67
    %v100 = vunpack.c.l.b16 %v68
    %v101 = vunpack.c.l.b16 %v69
    %v102 = vunpack.c.l.b16 %v70
    %v103 = vunpack.c.l.b16 %v71
    %v104 = vunpack.c.l.b16 %v72
    %v105 = vunpack.c.l.b16 %v73
    %v106 = vunpack.c.l.b16 %v74
    %v107 = vunpack.c.l.b16 %v75
    %v108 = vunpack.c.l.b16 %v76
    %v109 = vunpack.c.l.b16 %v77
    %v110 = vunpack.c.l.b16 %v78
    %v111 = vunpack.c.l.b16 %v79
    %v112 = vpack.c.b16 %v97, %v96
    %v113 = vpack.c.b16 %v99, %v98
    %v114 = vpack.c.b16 %v101, %v100
    %v115 = vpack.c.b16 %v103, %v102
    %v116 = vpack.c.b16 %v105, %v104
    %v117 = vpack.c.b16 %v107, %v106
    %v118 = vpack.c.b16 %v109, %v108
    %v119 = vpack.c.b16 %v111, %v110
    %vm120 = vcmask 523264
    %v122 = vsel %vm120, %v112, 0
    %v125 = vsel %vm120, %v113, 0
    %v128 = vsel %vm120, %v114, 0
    %v131 = vsel %vm120, %v115, 0
    %v134 = vsel %vm120, %v116, 0
    %v137 = vsel %vm120, %v117, 0
    %v140 = vsel %vm120, %v118, 0
    %v143 = vsel %vm120, %v119, 0
    %145 = vmatprep.subr.bf16.mxu0 0
    %146 = vmatpush1.bf16.msra.mxu0 %v60
    %147 = vmatprep.subr.bf16.mxu0 0
    %148 = vmatpush1.bf16.msra.mxu0 %v61
    %149 = vmatprep.subr.bf16.mxu0 0
    %150 = vmatpush1.bf16.msra.mxu0 %v62
    %151 = vmatprep.subr.bf16.mxu0 0
    %152 = vmatpush1.bf16.msra.mxu0 %v63
    %153 = vmatprep.subr.bf16.mxu0 0
    %154 = vmatpush1.bf16.msra.mxu0 0
    %155 = vmatprep.subr.bf16.mxu0 0
    %156 = vmatpush1.bf16.msra.mxu0 0
    %157 = vmatprep.subr.bf16.mxu0 0
    %158 = vmatpush1.bf16.msra.mxu0 0
    %159 = vmatprep.subr.bf16.mxu0 0
    %160 = vmatpush1.bf16.msra.mxu0 0
    %161 = vmatprep.subr.bf16.mxu0 0
    %162 = vmatpush1.bf16.msra.mxu0 0
    %163 = vmatprep.subr.bf16.mxu0 0
    %164 = vmatpush1.bf16.msra.mxu0 0
    %165 = vmatprep.subr.bf16.mxu0 0
    %166 = vmatpush1.bf16.msra.mxu0 0
    %167 = vmatprep.subr.bf16.mxu0 0
    %168 = vmatpush1.bf16.msra.mxu0 0
    %169 = vmatprep.subr.bf16.mxu0 0
    %170 = vmatpush1.bf16.msra.mxu0 0
    %171 = vmatprep.subr.bf16.mxu0 0
    %172 = vmatpush1.bf16.msra.mxu0 0
    %173 = vmatprep.subr.bf16.mxu0 0
    %174 = vmatpush1.bf16.msra.mxu0 0
    %175 = vmatprep.subr.bf16.mxu0 0
    %176 = vmatpush1.bf16.msra.mxu0 0
    %177 = vmatprep.mubr.bf16.mxu0 0
    %178 = vmatmul.mubr.bf16.gmra.mrb[0].mxu0 %v122
    %v179 = vpop.f32.mrb[0].mxu0
    %v180 = vadd.f32 0.0, %v179
    %v181 = vpop.f32.mrb[0].mxu0
    %v182 = vpop.f32.mrb[0].mxu0
    %v183 = vadd.f32 0.0, %v182
    %v184 = vpop.f32.mrb[0].mxu0
    %185 = vmatprep.mubr.bf16.mxu0 0
    %186 = vmatmul.mubr.bf16.gmra.mrb[0].mxu0 %v125
    %v187 = vpop.f32.mrb[0].mxu0
    %v188 = vadd.f32 0.0, %v187
    %v189 = vpop.f32.mrb[0].mxu0
    %v190 = vpop.f32.mrb[0].mxu0
    %v191 = vadd.f32 0.0, %v190
    %v192 = vpop.f32.mrb[0].mxu0
    %193 = vmatprep.mubr.bf16.mxu0 0
    %194 = vmatmul.mubr.bf16.gmra.mrb[0].mxu0 %v128
    %v195 = vpop.f32.mrb[0].mxu0
    %v196 = vadd.f32 0.0, %v195
    %v197 = vpop.f32.mrb[0].mxu0
    %v198 = vpop.f32.mrb[0].mxu0
    %v199 = vadd.f32 0.0, %v198
    %v200 = vpop.f32.mrb[0].mxu0
    %201 = vmatprep.mubr.bf16.mxu0 0
    %202 = vmatmul.mubr.bf16.gmra.mrb[0].mxu0 %v131
    %v203 = vpop.f32.mrb[0].mxu0
    %v204 = vadd.f32 0.0, %v203
    %v205 = vpop.f32.mrb[0].mxu0
    %v206 = vpop.f32.mrb[0].mxu0
    %v207 = vadd.f32 0.0, %v206
    %v208 = vpop.f32.mrb[0].mxu0
    %209 = vmatprep.mubr.bf16.mxu0 0
    %210 = vmatmul.mubr.bf16.gmra.mrb[0].mxu0 %v134
    %v211 = vpop.f32.mrb[0].mxu0
    %v212 = vadd.f32 0.0, %v211
    %v213 = vpop.f32.mrb[0].mxu0
    %v214 = vpop.f32.mrb[0].mxu0
    %v215 = vadd.f32 0.0, %v214
    %v216 = vpop.f32.mrb[0].mxu0
    %217 = vmatprep.mubr.bf16.mxu0 0
    %218 = vmatmul.mubr.bf16.gmra.mrb[0].mxu0 %v137
    %v219 = vpop.f32.mrb[0].mxu0
    %v220 = vadd.f32 0.0, %v219
    %v221 = vpop.f32.mrb[0].mxu0
    %v222 = vpop.f32.mrb[0].mxu0
    %v223 = vadd.f32 0.0, %v222
    %v224 = vpop.f32.mrb[0].mxu0
    %225 = vmatprep.mubr.bf16.mxu0 0
    %226 = vmatmul.mubr.bf16.gmra.mrb[0].mxu0 %v140
    %v227 = vpop.f32.mrb[0].mxu0
    %v228 = vadd.f32 0.0, %v227
    %v229 = vpop.f32.mrb[0].mxu0
    %v230 = vpop.f32.mrb[0].mxu0
    %v231 = vadd.f32 0.0, %v230
    %v232 = vpop.f32.mrb[0].mxu0
    %233 = vmatprep.mubr.bf16.mxu0 0
    %234 = vmatmul.mubr.bf16.gmra.mrb[0].mxu0 %v143
    %v235 = vpop.f32.mrb[0].mxu0
    %v236 = vadd.f32 0.0, %v235
    %v237 = vpop.f32.mrb[0].mxu0
    %v238 = vpop.f32.mrb[0].mxu0
    %v239 = vadd.f32 0.0, %v238
    %v240 = vpop.f32.mrb[0].mxu0
    %241 = vdwg.mxu0
    %v242 = vld [vmem:[%s2] sm:$0xf]
    %v243 = vld [vmem:[%s2 + $0x4] sm:$0xf]
    %v244 = vld [vmem:[%s2 + $0x8] sm:$0xf]
    %v245 = vld [vmem:[%s2 + $0xc] sm:$0xf]
    %v246 = vld [vmem:[%s2 + $0x10] sm:$0xf]
    %v247 = vld [vmem:[%s2 + $0x14] sm:$0xf]
    %v248 = vld [vmem:[%s2 + $0x18] sm:$0xf]
    %v249 = vld [vmem:[%s2 + $0x1c] sm:$0xf]
    %v250 = vld [vmem:[%s2 + $0x20] sm:$0xf]
    %v251 = vld [vmem:[%s2 + $0x24] sm:$0xf]
    %v252 = vld [vmem:[%s2 + $0x28] sm:$0xf]
    %v253 = vld [vmem:[%s2 + $0x2c] sm:$0xf]
    %v254 = vld [vmem:[%s2 + $0x30] sm:$0xf]
    %v255 = vld [vmem:[%s2 + $0x34] sm:$0xf]
    %v256 = vld [vmem:[%s2 + $0x38] sm:$0xf]
    %v257 = vld [vmem:[%s2 + $0x3c] sm:$0xf]
    %v258 = vpack.c.bf16 %v183, %v180
    %v259 = vpack.c.bf16 %v191, %v188
    %v260 = vpack.c.bf16 %v199, %v196
    %v261 = vpack.c.bf16 %v207, %v204
    %v262 = vpack.c.bf16 %v215, %v212
    %v263 = vpack.c.bf16 %v223, %v220
    %v264 = vpack.c.bf16 %v231, %v228
    %v265 = vpack.c.bf16 %v239, %v236
    %v266 = vld [vmem:[%s3] sm:$0xff]
    %v267 = vld [vmem:[%s3 + $0x8] sm:$0xff]
    %v268 = vld [vmem:[%s3 + $0x10] sm:$0xff]
    %v269 = vld [vmem:[%s3 + $0x18] sm:$0xff]
    %v270 = vld [vmem:[%s3 + $0x20] sm:$0xff]
    %v271 = vld [vmem:[%s3 + $0x28] sm:$0xff]
    %v272 = vld [vmem:[%s3 + $0x30] sm:$0xff]
    %v273 = vld [vmem:[%s3 + $0x38] sm:$0xff]
    %v274 = vld [vmem:[%s3 + $0x40] sm:$0xff]
    %v275 = vld [vmem:[%s3 + $0x48] sm:$0xff]
    %v276 = vld [vmem:[%s3 + $0x50] sm:$0xff]
    %v277 = vld [vmem:[%s3 + $0x58] sm:$0xff]
    %v278 = vld [vmem:[%s3 + $0x60] sm:$0xff]
    %v279 = vld [vmem:[%s3 + $0x68] sm:$0xff]
    %v280 = vld [vmem:[%s3 + $0x70] sm:$0xff]
    %v281 = vld [vmem:[%s3 + $0x78] sm:$0xff]
    %283 = vset.pattern.permute.xlu0 0
    %284 = vperm.xlu0 %283, %v266
    %v285 = vpop.permute.xlu0 %284
    %288 = vset.pattern.permute.xlu0 0
    %289 = vperm.xlu0 %288, %v267
    %v290 = vpop.permute.xlu0 %289
    %293 = vset.pattern.permute.xlu0 0
    %294 = vperm.xlu0 %293, %v268
    %v295 = vpop.permute.xlu0 %294
    %298 = vset.pattern.permute.xlu0 0
    %299 = vperm.xlu0 %298, %v269
    %v300 = vpop.permute.xlu0 %299
    %303 = vset.pattern.permute.xlu0 0
    %304 = vperm.xlu0 %303, %v270
    %v305 = vpop.permute.xlu0 %304
    %308 = vset.pattern.permute.xlu0 0
    %309 = vperm.xlu0 %308, %v271
    %v310 = vpop.permute.xlu0 %309
    %313 = vset.pattern.permute.xlu0 0
    %314 = vperm.xlu0 %313, %v272
    %v315 = vpop.permute.xlu0 %314
    %318 = vset.pattern.permute.xlu0 0
    %319 = vperm.xlu0 %318, %v273
    %v320 = vpop.permute.xlu0 %319
    %323 = vset.pattern.permute.xlu0 0
    %324 = vperm.xlu0 %323, %v274
    %v325 = vpop.permute.xlu0 %324
    %328 = vset.pattern.permute.xlu0 0
    %329 = vperm.xlu0 %328, %v275
    %v330 = vpop.permute.xlu0 %329
    %333 = vset.pattern.permute.xlu0 0
    %334 = vperm.xlu0 %333, %v276
    %v335 = vpop.permute.xlu0 %334
    %338 = vset.pattern.permute.xlu0 0
    %339 = vperm.xlu0 %338, %v277
    %v340 = vpop.permute.xlu0 %339
    %343 = vset.pattern.permute.xlu0 0
    %344 = vperm.xlu0 %343, %v278
    %v345 = vpop.permute.xlu0 %344
    %348 = vset.pattern.permute.xlu0 0
    %349 = vperm.xlu0 %348, %v279
    %v350 = vpop.permute.xlu0 %349
    %353 = vset.pattern.permute.xlu0 0
    %354 = vperm.xlu0 %353, %v280
    %v355 = vpop.permute.xlu0 %354
    %358 = vset.pattern.permute.xlu0 0
    %359 = vperm.xlu0 %358, %v281
    %v360 = vpop.permute.xlu0 %359
    %v378 = vunpack.c.l.b16 %v242
    %v379 = vunpack.c.l.b16 %v243
    %v380 = vunpack.c.l.b16 %v244
    %v381 = vunpack.c.l.b16 %v245
    %v382 = vunpack.c.l.b16 %v246
    %v383 = vunpack.c.l.b16 %v247
    %v384 = vunpack.c.l.b16 %v248
    %v385 = vunpack.c.l.b16 %v249
    %v386 = vunpack.c.l.b16 %v250
    %v387 = vunpack.c.l.b16 %v251
    %v388 = vunpack.c.l.b16 %v252
    %v389 = vunpack.c.l.b16 %v253
    %v390 = vunpack.c.l.b16 %v254
    %v391 = vunpack.c.l.b16 %v255
    %v392 = vunpack.c.l.b16 %v256
    %v393 = vunpack.c.l.b16 %v257
    %v394 = vpack.c.b16 %v379, %v378
    %v395 = vpack.c.b16 %v381, %v380
    %v396 = vpack.c.b16 %v383, %v382
    %v397 = vpack.c.b16 %v385, %v384
    %v398 = vpack.c.b16 %v387, %v386
    %v399 = vpack.c.b16 %v389, %v388
    %v400 = vpack.c.b16 %v391, %v390
    %v401 = vpack.c.b16 %v393, %v392
    %410 = vmatprep.subr.bf16.mxu0 0
    %411 = vmatpush1.bf16.msra.mxu0 %v258
    %412 = vmatprep.subr.bf16.mxu0 0
    %413 = vmatpush1.bf16.msra.mxu0 %v259
    %414 = vmatprep.subr.bf16.mxu0 0
    %415 = vmatpush1.bf16.msra.mxu0 %v260
    %416 = vmatprep.subr.bf16.mxu0 0
    %417 = vmatpush1.bf16.msra.mxu0 %v261
    %418 = vmatprep.subr.bf16.mxu0 0
    %419 = vmatpush1.bf16.msra.mxu0 %v262
    %420 = vmatprep.subr.bf16.mxu0 0
    %421 = vmatpush1.bf16.msra.mxu0 %v263
    %422 = vmatprep.subr.bf16.mxu0 0
    %423 = vmatpush1.bf16.msra.mxu0 %v264
    %424 = vmatprep.subr.bf16.mxu0 0
    %425 = vmatpush1.bf16.msra.mxu0 %v265
    %426 = vmatprep.subr.bf16.mxu0 0
    %427 = vmatpush1.bf16.msra.mxu0 0
    %428 = vmatprep.subr.bf16.mxu0 0
    %429 = vmatpush1.bf16.msra.mxu0 0
    %430 = vmatprep.subr.bf16.mxu0 0
    %431 = vmatpush1.bf16.msra.mxu0 0
    %432 = vmatprep.subr.bf16.mxu0 0
    %433 = vmatpush1.bf16.msra.mxu0 0
    %434 = vmatprep.subr.bf16.mxu0 0
    %435 = vmatpush1.bf16.msra.mxu0 0
    %436 = vmatprep.subr.bf16.mxu0 0
    %437 = vmatpush1.bf16.msra.mxu0 0
    %438 = vmatprep.subr.bf16.mxu0 0
    %439 = vmatpush1.bf16.msra.mxu0 0
    %440 = vmatprep.subr.bf16.mxu0 0
    %441 = vmatpush1.bf16.msra.mxu0 0
    %442 = vmatprep.mubr.bf16.mxu0 0
    %443 = vmatmul.mubr.bf16.gmra.mrb[0].mxu0 %v394
    %v444 = vpop.f32.mrb[0].mxu0
    %v445 = vadd.f32 %v285, %v444
    %v446 = vpop.f32.mrb[0].mxu0
    %v447 = vpop.f32.mrb[0].mxu0
    %v448 = vadd.f32 %v290, %v447
    %v449 = vpop.f32.mrb[0].mxu0
    %450 = vmatprep.mubr.bf16.mxu0 0
    %451 = vmatmul.mubr.bf16.gmra.mrb[0].mxu0 %v395
    %v452 = vpop.f32.mrb[0].mxu0
    %v453 = vadd.f32 %v295, %v452
    %v454 = vpop.f32.mrb[0].mxu0
    %v455 = vpop.f32.mrb[0].mxu0
    %v456 = vadd.f32 %v300, %v455
    %v457 = vpop.f32.mrb[0].mxu0
    %458 = vmatprep.mubr.bf16.mxu0 0
    %459 = vmatmul.mubr.bf16.gmra.mrb[0].mxu0 %v396
    %v460 = vpop.f32.mrb[0].mxu0
    %v461 = vadd.f32 %v305, %v460
    %v462 = vpop.f32.mrb[0].mxu0
    %v463 = vpop.f32.mrb[0].mxu0
    %v464 = vadd.f32 %v310, %v463
    %v465 = vpop.f32.mrb[0].mxu0
    %466 = vmatprep.mubr.bf16.mxu0 0
    %467 = vmatmul.mubr.bf16.gmra.mrb[0].mxu0 %v397
    %v468 = vpop.f32.mrb[0].mxu0
    %v469 = vadd.f32 %v315, %v468
    %v470 = vpop.f32.mrb[0].mxu0
    %v471 = vpop.f32.mrb[0].mxu0
    %v472 = vadd.f32 %v320, %v471
    %v473 = vpop.f32.mrb[0].mxu0
    %474 = vmatprep.mubr.bf16.mxu0 0
    %475 = vmatmul.mubr.bf16.gmra.mrb[0].mxu0 %v398
    %v476 = vpop.f32.mrb[0].mxu0
    %v477 = vadd.f32 %v325, %v476
    %v478 = vpop.f32.mrb[0].mxu0
    %v479 = vpop.f32.mrb[0].mxu0
    %v480 = vadd.f32 %v330, %v479
    %v481 = vpop.f32.mrb[0].mxu0
    %482 = vmatprep.mubr.bf16.mxu0 0
    %483 = vmatmul.mubr.bf16.gmra.mrb[0].mxu0 %v399
    %v484 = vpop.f32.mrb[0].mxu0
    %v485 = vadd.f32 %v335, %v484
    %v486 = vpop.f32.mrb[0].mxu0
    %v487 = vpop.f32.mrb[0].mxu0
    %v488 = vadd.f32 %v340, %v487
    %v489 = vpop.f32.mrb[0].mxu0
    %490 = vmatprep.mubr.bf16.mxu0 0
    %491 = vmatmul.mubr.bf16.gmra.mrb[0].mxu0 %v400
    %v492 = vpop.f32.mrb[0].mxu0
    %v493 = vadd.f32 %v345, %v492
    %v494 = vpop.f32.mrb[0].mxu0
    %v495 = vpop.f32.mrb[0].mxu0
    %v496 = vadd.f32 %v350, %v495
    %v497 = vpop.f32.mrb[0].mxu0
    %498 = vmatprep.mubr.bf16.mxu0 0
    %499 = vmatmul.mubr.bf16.gmra.mrb[0].mxu0 %v401
    %v500 = vpop.f32.mrb[0].mxu0
    %v501 = vadd.f32 %v355, %v500
    %v502 = vpop.f32.mrb[0].mxu0
    %v503 = vpop.f32.mrb[0].mxu0
    %v504 = vadd.f32 %v360, %v503
    %v505 = vpop.f32.mrb[0].mxu0
    %506 = vdwg.mxu0
    %v507 = vtanh.pop %v445
    %v508 = vtanh.pop %v448
    %v509 = vtanh.pop %v453
    %v510 = vtanh.pop %v456
    %v511 = vtanh.pop %v461
    %v512 = vtanh.pop %v464
    %v513 = vtanh.pop %v469
    %v514 = vtanh.pop %v472
    %v515 = vtanh.pop %v477
    %v516 = vtanh.pop %v480
    %v517 = vtanh.pop %v485
    %v518 = vtanh.pop %v488
    %v519 = vtanh.pop %v493
    %v520 = vtanh.pop %v496
    %v521 = vtanh.pop %v501
    %v522 = vtanh.pop %v504
    %v523 = vld [vmem:[%s4] sm:$0x1]
    %v524 = vpack.c.bf16 %v508, %v507
    %v525 = vpack.c.bf16 %v510, %v509
    %v526 = vpack.c.bf16 %v512, %v511
    %v527 = vpack.c.bf16 %v514, %v513
    %v528 = vpack.c.bf16 %v516, %v515
    %v529 = vpack.c.bf16 %v518, %v517
    %v530 = vpack.c.bf16 %v520, %v519
    %v531 = vpack.c.bf16 %v522, %v521
    %532 = vmatprep.subr.bf16.mxu0 0
    %533 = vmatpush1.bf16.msra.mxu0 %v524
    %534 = vmatprep.subr.bf16.mxu0 0
    %535 = vmatpush1.bf16.msra.mxu0 %v525
    %536 = vmatprep.subr.bf16.mxu0 0
    %537 = vmatpush1.bf16.msra.mxu0 %v526
    %538 = vmatprep.subr.bf16.mxu0 0
    %539 = vmatpush1.bf16.msra.mxu0 %v527
    %540 = vmatprep.subr.bf16.mxu0 0
    %541 = vmatpush1.bf16.msra.mxu0 %v528
    %542 = vmatprep.subr.bf16.mxu0 0
    %543 = vmatpush1.bf16.msra.mxu0 %v529
    %544 = vmatprep.subr.bf16.mxu0 0
    %545 = vmatpush1.bf16.msra.mxu0 %v530
    %546 = vmatprep.subr.bf16.mxu0 0
    %547 = vmatpush1.bf16.msra.mxu0 %v531
    %548 = vmatprep.subr.bf16.mxu0 0
    %549 = vmatpush1.bf16.msra.mxu0 0
    %550 = vmatprep.subr.bf16.mxu0 0
    %551 = vmatpush1.bf16.msra.mxu0 0
    %552 = vmatprep.subr.bf16.mxu0 0
    %553 = vmatpush1.bf16.msra.mxu0 0
    %554 = vmatprep.subr.bf16.mxu0 0
    %555 = vmatpush1.bf16.msra.mxu0 0
    %556 = vmatprep.subr.bf16.mxu0 0
    %557 = vmatpush1.bf16.msra.mxu0 0
    %558 = vmatprep.subr.bf16.mxu0 0
    %559 = vmatpush1.bf16.msra.mxu0 0
    %560 = vmatprep.subr.bf16.mxu0 0
    %561 = vmatpush1.bf16.msra.mxu0 0
    %562 = vmatprep.subr.bf16.mxu0 0
    %563 = vmatpush1.bf16.msra.mxu0 0
    %564 = vmatprep.mubr.bf16.mxu0 0
    %565 = vmatmul.mubr.bf16.gmra.mrb[0].mxu0 %v523
    %v566 = vpop.f32.mrb[0].mxu0
    %v567 = vadd.f32 0.0, %v566
    %v568 = vpop.f32.mrb[0].mxu0
    %v569 = vpop.f32.mrb[0].mxu0
    %v570 = vpop.f32.mrb[0].mxu0
    %571 = vdwg.mxu0
    %572 = vst [vmem:[#allocation2] sm:$0x1] %v567
    // Predicated region
    $region22: #{tpu_custom_call.1} parent=1 // pred_check
      _
    $region23: #{tpu_custom_call.1} parent=1 // pred_check_branch
      %574 = sbr.rel (0) target = $region25
    $region24: #{tpu_custom_call.1} parent=1 // pred_region
      %s576 = ssub.s32 16, 16
      %577 = vsyncadd [#allocation3], %s576
      %s579 = sshll.u32 [#allocation2], 4
      %s580 = int_to_ptr.vmem [resolvable:$true] %s579
      %582 = dma.vmem_to_hbm [thread:$0]  %s580, 16, %s5, [#allocation3]
    $region25: #{tpu_custom_call.1} parent=1 // pred_fallthru
      _
    // Predicated region
    $region26: #{tpu_custom_call.1} parent=1 // pred_check
      _
    $region27: #{tpu_custom_call.1} parent=1 // pred_check_branch
      %584 = sbr.rel (0) target = $region29
    $region28: #{tpu_custom_call.1} parent=1 // pred_region
      %585 = dma.done [#allocation3], 16
    $region29: #{tpu_custom_call.1} parent=1 // pred_fallthru
      _
    %586 = vsyncpa [#allocation3], 1

</llo_original>
